<compile_context>
chip_gen: v6e
topology: v6e:2x2x1
jax: 0.10.0
libtpu: 0.0.40
codegen_flags: <defaults>
</compile_context>

<pallas_src>
import functools

import jax
import jax.numpy as jnp
import numpy as np
from jax import lax
from jax.experimental import pallas as pl
from jax.experimental.pallas import tpu as pltpu


# Sized for v7x's 64 MiB physical VMEM (also fine on v5e/v6e's 128 MiB).
_VMEM_LIMIT_BYTES = 48 * 1024 * 1024


# ----------------------------------------------------------------------------
# 1x1 lateral conv:  tiled matmul over M = N*H*W rows, fused residual add.
# ----------------------------------------------------------------------------
def _conv1x1_kernel(x_ref, w_ref, b_ref, o_ref):
    # x: (TM, Cin)  w: (Cin, Cout)  b: (1, Cout)  o: (TM, Cout)
    acc = jnp.dot(x_ref[...], w_ref[...], preferred_element_type=jnp.float32)
    o_ref[...] = (acc + b_ref[...]).astype(o_ref.dtype)


def _conv1x1_add_kernel(x_ref, w_ref, b_ref, add_ref, o_ref):
    # Same as above with the top-down residual fused in (no extra HBM pass for
    # a separate "lateral + topdown" add op).
    acc = jnp.dot(x_ref[...], w_ref[...], preferred_element_type=jnp.float32)
    acc = acc + b_ref[...] + add_ref[...].astype(jnp.float32)
    o_ref[...] = acc.astype(o_ref.dtype)


def conv1x1(x_nhwc, w_io, b, add=None, *, tile_m=256, compute_dtype=None):
    """1x1 conv + bias (+ optional fused residual add), NHWC.

    Tiled over the flattened M = N*H*W dimension so the pipeline double-buffers
    TM-row blocks (bounded VMEM, works at production resolutions) and the grid
    axis is 'parallel' so v7x's two TensorCores both get work.
    tile_m: 256 keeps v5e happy; can be raised to 512-1024 on v6e/v7x.
    """
    N, H, W, Cin = x_nhwc.shape
    Cout = w_io.shape[1]
    out_dtype = x_nhwc.dtype
    if compute_dtype is not None:            # e.g. bf16 on v6e/v7x; acc stays f32
        x_nhwc = x_nhwc.astype(compute_dtype)
        w_io = w_io.astype(compute_dtype)

    M = N * H * W
    x2 = x_nhwc.reshape(M, Cin)
    b2 = b.reshape(1, Cout).astype(jnp.float32)
    tm = min(tile_m, M)
    grid = (pl.cdiv(M, tm),)

    in_specs = [
        pl.BlockSpec((tm, Cin), lambda i: (i, 0)),
        pl.BlockSpec((Cin, Cout), lambda i: (0, 0)),
        pl.BlockSpec((1, Cout), lambda i: (0, 0)),
    ]
    args = [x2, w_io, b2]
    if add is None:
        kernel = _conv1x1_kernel                       # no zeros-add traffic
    else:
        kernel = _conv1x1_add_kernel
        in_specs.append(pl.BlockSpec((tm, Cout), lambda i: (i, 0)))
        args.append(add.reshape(M, Cout))

    out = pl.pallas_call(
        kernel,
        grid=grid,
        in_specs=in_specs,
        out_specs=pl.BlockSpec((tm, Cout), lambda i: (i, 0)),
        out_shape=jax.ShapeDtypeStruct((M, Cout), out_dtype),
        compiler_params=pltpu.CompilerParams(
            dimension_semantics=("parallel",),
            vmem_limit_bytes=_VMEM_LIMIT_BYTES),
    )(*args)
    return out.reshape(N, H, W, Cout)


# ----------------------------------------------------------------------------
# 3x3 "same" output conv:  row-strip kernel on a flat, row-major padded image.
# ----------------------------------------------------------------------------
def _pick_strip_rows(H, row_len, chans, cap=8, target_elems=512 * 1024):
    """Largest divisor TH of H that keeps the output strip (8,128)-legal,
    <= cap rows, and with a bounded VMEM footprint."""
    cands = [t for t in range(1, H + 1)
             if H % t == 0 and (t == H or (t * row_len) % 8 == 0)]
    fits = [t for t in cands if t * row_len * chans <= target_elems]
    good = [t for t in fits if t <= cap]
    if good:
        return max(good)
    return min(fits) if fits else min(cands)


def _conv3x3_kernel(TH, row_len, xpf_ref, w_ref, b_ref, o_ref):
    # xpf_ref: (1, (H+3)*(W+2), Cin)  flat zero-padded image, resident per batch
    # w_ref  : (9, Cin, Cout)         (kh, kw)-major
    # b_ref  : (1, Cout)
    # o_ref  : (1, TH*(W+2), Cout)    padded-width output strip (host crops)
    L = TH * row_len
    Cout = o_ref.shape[-1]
    h0 = pl.program_id(1) * TH

    acc = jnp.zeros((L, Cout), jnp.float32) + b_ref[...]
    # 9 strip-sized dots (M = TH*(W+2)) instead of per-row tiny dots; the kw
    # shift is expressed purely as a shifted flat read (no extra VMEM slices).
    for kh in range(3):
        base = (h0 + kh) * row_len
        for kw in range(3):
            tap = xpf_ref[0, pl.ds(base + kw, L), :]          # (L, Cin)
            acc = acc + jnp.dot(tap, w_ref[kh * 3 + kw],
                                preferred_element_type=jnp.float32)
    o_ref[0] = acc.astype(o_ref.dtype)


def conv3x3_same(x_nhwc, w_flat, b, *, tile_h=8, compute_dtype=None):
    """3x3 conv, stride 1, padding 1, + bias.  NHWC.  w_flat: (9, Cin, Cout)."""
    N, H, W, Cin = x_nhwc.shape
    Cout = w_flat.shape[-1]
    out_dtype = x_nhwc.dtype
    if compute_dtype is not None:
        x_nhwc = x_nhwc.astype(compute_dtype)
        w_flat = w_flat.astype(compute_dtype)

    row_len = W + 2
    # One host-side zero pad builds the 3x3 "same" halo; the extra bottom rows
    # keep the shifted flat reads in bounds for the last strip.
    # TODO(synk): the halo pad is still one extra HBM pass per level; an
    # in-kernel halo (masked edge taps / manual halo DMA) would remove it and
    # also bound VMEM for very large images (the whole padded image is kept
    # resident per batch element here).
    xp = jnp.pad(x_nhwc, ((0, 0), (1, 2), (1, 1), (0, 0)))
    xpf = xp.reshape(N, (H + 3) * row_len, Cin)
    b2 = b.reshape(1, Cout).astype(jnp.float32)

    TH = _pick_strip_rows(H, row_len, max(Cin, Cout), cap=tile_h)
    grid = (N, H // TH)

    out = pl.pallas_call(
        functools.partial(_conv3x3_kernel, TH, row_len),
        grid=grid,
        in_specs=[
            pl.BlockSpec((1, (H + 3) * row_len, Cin), lambda n, h: (n, 0, 0)),
            pl.BlockSpec((9, Cin, Cout), lambda n, h: (0, 0, 0)),
            pl.BlockSpec((1, Cout), lambda n, h: (0, 0)),
        ],
        out_specs=pl.BlockSpec((1, TH * row_len, Cout), lambda n, h: (n, h, 0)),
        out_shape=jax.ShapeDtypeStruct((N, H * row_len, Cout), out_dtype),
        compiler_params=pltpu.CompilerParams(
            dimension_semantics=("parallel", "parallel"),
            vmem_limit_bytes=_VMEM_LIMIT_BYTES),
    )(xpf, w_flat, b2)
    # Drop the two junk padded-width column slots.
    return out.reshape(N, H, row_len, Cout)[:, :, :W, :]


# ----------------------------------------------------------------------------
# JAX glue
# ----------------------------------------------------------------------------
def _nearest_resize_nhwc(x, h_out, w_out):
    # F.interpolate(mode='nearest'): src_idx = floor(dst_idx * in/out)
    _, h_in, w_in, _ = x.shape
    hi = (jnp.arange(h_out) * h_in) // h_out
    wi = (jnp.arange(w_out) * w_in) // w_out
    return x[:, hi][:, :, wi]


def fpn_forward_pallas(params, body_feats_nchw, min_level=2, max_level=6,
                       spatial_scale=(1.0 / 32, 1.0 / 16, 1.0 / 8, 1.0 / 4),
                       compute_dtype=None):
    """body_feats_nchw: [c2, c3, c4, c5] (finest -> coarsest), NCHW float32."""
    spatial_scale = list(spatial_scale)
    n = len(body_feats_nchw)
    # reverse: feats[0] = coarsest (C5).  NCHW<->NHWC only at the boundary.
    feats = [jnp.transpose(x, (0, 2, 3, 1)) for x in body_feats_nchw[::-1]]

    inner = [None] * n
    inner[0] = conv1x1(feats[0], params["inner_w"][0], params["inner_b"][0],
                       compute_dtype=compute_dtype)
    for i in range(1, n):
        body = feats[i]
        # TODO(synk): for the exact-2x case the nearest upsample could be folded
        # into the add-operand BlockSpec (half-height blocks + in-register row
        # doubling) to save one full-tensor HBM round trip per level.
        topdown = _nearest_resize_nhwc(inner[i - 1], body.shape[1], body.shape[2])
        # lateral 1x1 conv with the top-down add fused into the kernel
        inner[i] = conv1x1(body, params["inner_w"][i], params["inner_b"][i],
                           add=topdown, compute_dtype=compute_dtype)

    outputs = [conv3x3_same(inner[i], params["fpn_w"][i], params["fpn_b"][i],
                            compute_dtype=compute_dtype)
               for i in range(n)]

    if max_level - min_level == len(spatial_scale):
        # MaxPool2d(kernel_size=1, stride=2) == strided subsampling (no window)
        outputs.insert(0, outputs[0][:, ::2, ::2, :])
        spatial_scale.insert(0, spatial_scale[0] * 0.5)

    out_nchw = [jnp.transpose(y, (0, 3, 1, 2)) for y in outputs]
    return out_nchw, spatial_scale


# ----------------------------------------------------------------------------
# Pure-JAX reference (mirrors the PyTorch module) for correctness checking
# ----------------------------------------------------------------------------
def _ref_conv(x_nchw, w_oihw, b, pad):
    y = lax.conv_general_dilated(
        x_nchw, w_oihw, (1, 1), ((pad, pad), (pad, pad)),
        dimension_numbers=("NCHW", "OIHW", "NCHW"),
        precision=lax.Precision.HIGHEST)
    return y + b.reshape(1, -1, 1, 1)


def _nearest_resize_nchw(x, h_out, w_out):
    _, _, h_in, w_in = x.shape
    hi = (jnp.arange(h_out) * h_in) // h_out
    wi = (jnp.arange(w_out) * w_in) // w_out
    return x[:, :, hi][:, :, :, wi]


def fpn_forward_ref(params, body_feats_nchw, min_level=2, max_level=6,
                    spatial_scale=(1.0 / 32, 1.0 / 16, 1.0 / 8, 1.0 / 4)):
    spatial_scale = list(spatial_scale)
    n = len(body_feats_nchw)
    feats = body_feats_nchw[::-1]
    inner = [_ref_conv(feats[0], params["inner_w_oihw"][0], params["inner_b"][0], pad=0)]
    for i in range(1, n):
        lateral = _ref_conv(feats[i], params["inner_w_oihw"][i], params["inner_b"][i], pad=0)
        topdown = _nearest_resize_nchw(inner[i - 1], feats[i].shape[2], feats[i].shape[3])
        inner.append(lateral + topdown)
    outputs = [_ref_conv(inner[i], params["fpn_w_oihw"][i], params["fpn_b"][i], pad=1)
               for i in range(n)]
    if max_level - min_level == len(spatial_scale):
        outputs.insert(0, outputs[0][:, :, ::2, ::2])
        spatial_scale.insert(0, spatial_scale[0] * 0.5)
    return outputs, spatial_scale


# ----------------------------------------------------------------------------
# Deterministic parameter construction
# ----------------------------------------------------------------------------
def make_params(in_channels, num_chan, key):
    params = {"inner_w": [], "inner_b": [], "fpn_w": [], "fpn_b": [],
              "inner_w_oihw": [], "fpn_w_oihw": []}
    for cin in in_channels:
        key, k1, k2 = jax.random.split(key, 3)
        w = 0.1 * jax.random.normal(k1, (num_chan, cin, 1, 1), jnp.float32)   # OIHW
        b = 0.1 * jax.random.normal(k2, (num_chan,), jnp.float32)
        params["inner_w_oihw"].append(w)
        params["inner_w"].append(w[:, :, 0, 0].T)                              # (Cin, Cout)
        params["inner_b"].append(b)
    for _ in in_channels:
        key, k1, k2 = jax.random.split(key, 3)
        w = 0.1 * jax.random.normal(k1, (num_chan, num_chan, 3, 3), jnp.float32)  # OIHW
        b = 0.1 * jax.random.normal(k2, (num_chan,), jnp.float32)
        params["fpn_w_oihw"].append(w)
        # (kh, kw, Cin, Cout) flattened to (9, Cin, Cout), (kh, kw)-major
        params["fpn_w"].append(
            jnp.transpose(w, (2, 3, 1, 0)).reshape(9, num_chan, num_chan))
        params["fpn_b"].append(b)
    return params


# ----------------------------------------------------------------------------
if __name__ == "__main__":
    key = jax.random.PRNGKey(0)

    # Small shapes consistent with the module: in_channels ordered coarsest->finest.
    in_channels = [64, 32, 16, 8]     # stands in for [2048, 1024, 512, 256]
    num_chan = 16                     # stands in for 256
    batch = 2

    key, kc2, kc3, kc4, kc5, kp = jax.random.split(key, 6)
    # body_feats = [c2, c3, c4, c5]  (finest -> coarsest), NCHW
    c2 = jax.random.normal(kc2, (batch, 8, 16, 16), jnp.float32)
    c3 = jax.random.normal(kc3, (batch, 16, 8, 8), jnp.float32)
    c4 = jax.random.normal(kc4, (batch, 32, 4, 4), jnp.float32)
    c5 = jax.random.normal(kc5, (batch, 64, 2, 2), jnp.float32)
    body_feats = [c2, c3, c4, c5]

    params = make_params(in_channels, num_chan, kp)

    outs, scales = fpn_forward_pallas(params, body_feats)
    outs = [jax.block_until_ready(o) for o in outs]

    ref_outs, ref_scales = fpn_forward_ref(params, body_feats)

    assert scales == ref_scales, (scales, ref_scales)
    assert len(outs) == 5
    expected_shapes = [(2, 16, 1, 1), (2, 16, 2, 2), (2, 16, 4, 4),
                       (2, 16, 8, 8), (2, 16, 16, 16)]
    for o, r, s in zip(outs, ref_outs, expected_shapes):
        assert o.shape == s, (o.shape, s)
        np.testing.assert_allclose(np.asarray(o), np.asarray(r), rtol=1e-2, atol=1e-2)

    print("KERNEL_OK")
</pallas_src>

<mosaic_0001>
module attributes {stable_mosaic.version = 11 : i64} {
  func.func @_conv1x1_kernel(%arg0: i32, %arg1: memref<8x64xf32, #tpu.memory_space<vmem>>, %arg2: memref<64x16xf32, #tpu.memory_space<vmem>>, %arg3: memref<1x16xf32, #tpu.memory_space<vmem>>, %arg4: memref<8x16xf32, #tpu.memory_space<vmem>>) attributes {dimension_semantics = [#tpu.dimension_semantics<parallel>], iteration_bounds = array<i64: 1>, scalar_prefetch = 0 : i64, scratch_operands = 0 : i64, tpu.core_type = #tpu.core_type<tc>, window_params = [{transform_indices = @transform_0, window_bounds = array<i64: 8, 64>}, {pipeline_mode = #tpu.pipeline_mode<synchronous>, transform_indices = @transform_1, window_bounds = array<i64: 64, 16>}, {pipeline_mode = #tpu.pipeline_mode<synchronous>, transform_indices = @transform_2, window_bounds = array<i64: 1, 16>}, {transform_indices = @transform_3, window_bounds = array<i64: 8, 16>}]} {
    %c0 = arith.constant 0 : index
    %c0_0 = arith.constant 0 : index
    %0 = vector.load %arg1[%c0, %c0_0] : memref<8x64xf32, #tpu.memory_space<vmem>>, vector<8x64xf32>
    %c0_1 = arith.constant 0 : index
    %c0_2 = arith.constant 0 : index
    %1 = vector.load %arg2[%c0_1, %c0_2] : memref<64x16xf32, #tpu.memory_space<vmem>>, vector<64x16xf32>
    %cst = arith.constant dense<0.000000e+00> : vector<8x16xf32>
    %2 = tpu.matmul %0, %1, %cst {dimension_numbers = #tpu.dot_dimension_numbers<[1], [0], [0], [1], [0, 0, 1, 1], [], []>} : vector<8x64xf32>, vector<64x16xf32>, vector<8x16xf32> -> vector<8x16xf32>
    %c0_3 = arith.constant 0 : index
    %c0_4 = arith.constant 0 : index
    %3 = vector.load %arg3[%c0_3, %c0_4] : memref<1x16xf32, #tpu.memory_space<vmem>>, vector<1x16xf32>
    %4 = vector.broadcast %3 : vector<1x16xf32> to vector<8x16xf32>
    %5 = arith.addf %2, %4 : vector<8x16xf32>
    %c0_5 = arith.constant 0 : index
    %c0_6 = arith.constant 0 : index
    %6 = vector.load %arg4[%c0_5, %c0_6] : memref<8x16xf32, #tpu.memory_space<vmem>>, vector<8x16xf32>
    tpu.vector_store %arg4[%c0_5, %c0_6], %5 {strides = array<i32>} : memref<8x16xf32, #tpu.memory_space<vmem>>, vector<8x16xf32>,
    return
  }
  func.func @transform_0(%arg0: i32) -> (i32, i32) {
    %c0_i32 = arith.constant 0 : i32
    %c0_i32_0 = arith.constant 0 : i32
    return %arg0, %c0_i32 : i32, i32
  }
  func.func @transform_1(%arg0: i32) -> (i32, i32) {
    %c0_i32 = arith.constant 0 : i32
    %c0_i32_0 = arith.constant 0 : i32
    %c0_i32_1 = arith.constant 0 : i32
    return %c0_i32, %c0_i32_0 : i32, i32
  }
  func.func @transform_2(%arg0: i32) -> (i32, i32) {
    %c0_i32 = arith.constant 0 : i32
    %c0_i32_0 = arith.constant 0 : i32
    %c0_i32_1 = arith.constant 0 : i32
    return %c0_i32, %c0_i32_0 : i32, i32
  }
  func.func @transform_3(%arg0: i32) -> (i32, i32) {
    %c0_i32 = arith.constant 0 : i32
    %c0_i32_0 = arith.constant 0 : i32
    return %arg0, %c0_i32 : i32, i32
  }
}

</mosaic_0001>

<llo_original>
// kernel: tpu_custom_call.1
$region0: #{tpu_custom_call.1}
  #allocation0 [shape = 'u32[]', space=smem, size = 0x4, offset = 0x4, fixed_abs, tag = 'smem constant byte address 0x4 - core index']
  #allocation1 [shape = 'u32[144,128]{1,0:T(1,128)}', space=vmem, size = 0x12000, scoped, tag = 'internal scratch']
  %s0 = inlined_call_operand.vmem [shape: f32[8,64], index: 0, kind: input, shape index: {}]
  %s1 = inlined_call_operand.vmem [shape: f32[64,16], index: 1, kind: input, shape index: {}]
  %s2 = inlined_call_operand.vmem [shape: f32[1,16], index: 2, kind: input, shape index: {}]
  %s3 = inlined_call_operand.hbm [shape: f32[8,16], index: 3, kind: output, shape index: {}]
  %s4 = sld [smem:[#allocation0]]
  $region22: #{tpu_custom_call.1} parent=0
    _
  %s6 = ssub.s32 1, %s4
  %s7 = scalar_select 0, %s6, %s4
  $region1: #{tpu_custom_call.1} parent=0
    #allocation2 [shape = 'u8[4096]{0}', space=vmem, size = 0x1000, scoped, tag = 'output window, operand 0, single buffered']
    #allocation3 [shape = 's32[1]{0}', space=sflag, size = 0x4, scoped, tag = 'scoped memory for tpu_custom_call.1']
    %8 = vsyncpa [#allocation3], 0
    // Predicated region
    $region2: #{tpu_custom_call.1} parent=1 // pred_check
      _
    $region3: #{tpu_custom_call.1} parent=1 // pred_check_branch
      %10 = sbr.rel (0) target = $region5
    $region4: #{tpu_custom_call.1} parent=1 // pred_region
      _
    $region5: #{tpu_custom_call.1} parent=1 // pred_fallthru
      _
    // Predicated region
    $region6: #{tpu_custom_call.1} parent=1 // pred_check
      _
    $region7: #{tpu_custom_call.1} parent=1 // pred_check_branch
      %12 = sbr.rel (0) target = $region9
    $region8: #{tpu_custom_call.1} parent=1 // pred_region
      _
    $region9: #{tpu_custom_call.1} parent=1 // pred_fallthru
      _
    // Predicated region
    $region10: #{tpu_custom_call.1} parent=1 // pred_check
      _
    $region11: #{tpu_custom_call.1} parent=1 // pred_check_branch
      %14 = sbr.rel (0) target = $region13
    $region12: #{tpu_custom_call.1} parent=1 // pred_region
      _
    $region13: #{tpu_custom_call.1} parent=1 // pred_fallthru
      _
    %v15 = vld [vmem:[%s0] sm:$0xff]
    %v16 = vld [vmem:[%s1] sm:$0xff]
    %v17 = vld [vmem:[%s1 + $0x8] sm:$0xff]
    %v18 = vld [vmem:[%s1 + $0x10] sm:$0xff]
    %v19 = vld [vmem:[%s1 + $0x18] sm:$0xff]
    %v20 = vld [vmem:[%s1 + $0x20] sm:$0xff]
    %v21 = vld [vmem:[%s1 + $0x28] sm:$0xff]
    %v22 = vld [vmem:[%s1 + $0x30] sm:$0xff]
    %v23 = vld [vmem:[%s1 + $0x38] sm:$0xff]
    %v24 = vld [vmem:[%s2] sm:$0x1]
    %v26 = vlaneseq
    %v27 = vshrl.u32 %v26, 7
    %v28 = vsub.s32 0, %v27
    %v29 = vrot.slane %v24, %v28
    %vm31 = vcmask 523264
    %v33 = vsel %vm31, %v15, 0
    %35 = vmatprep.subr.mxu0 0.0
    %36 = vmatpush1.msra.mxu0 0.0
    %37 = vmatprep.subr.mxu0 0.0
    %38 = vmatpush1.msra.mxu0 0.0
    %39 = vmatprep.subr.mxu0 0.0
    %40 = vmatpush1.msra.mxu0 0.0
    %41 = vmatprep.subr.mxu0 0.0
    %42 = vmatpush1.msra.mxu0 0.0
    %43 = vmatprep.subr.mxu0 0.0
    %44 = vmatpush1.msra.mxu0 0.0
    %45 = vmatprep.subr.mxu0 0.0
    %46 = vmatpush1.msra.mxu0 0.0
    %47 = vmatprep.subr.mxu0 0.0
    %48 = vmatpush1.msra.mxu0 0.0
    %49 = vmatprep.subr.mxu0 0.0
    %50 = vmatpush1.msra.mxu0 0.0
    %51 = vmatprep.subr.mxu0 0.0
    %52 = vmatpush1.msra.mxu0 %v23
    %53 = vmatprep.subr.mxu0 0.0
    %54 = vmatpush1.msra.mxu0 %v22
    %55 = vmatprep.subr.mxu0 0.0
    %56 = vmatpush1.msra.mxu0 %v21
    %57 = vmatprep.subr.mxu0 0.0
    %58 = vmatpush1.msra.mxu0 %v20
    %59 = vmatprep.subr.mxu0 0.0
    %60 = vmatpush1.msra.mxu0 %v19
    %61 = vmatprep.subr.mxu0 0.0
    %62 = vmatpush1.msra.mxu0 %v18
    %63 = vmatprep.subr.mxu0 0.0
    %64 = vmatpush1.msra.mxu0 %v17
    %65 = vmatprep.subr.mxu0 0.0
    %66 = vmatpush1.msra.mxu0 %v16
    %67 = vmatprep.subr.mxu0 0.0
    %68 = vmatpush2.msra.mxu0 0.0
    %69 = vmatprep.subr.mxu0 0.0
    %70 = vmatpush2.msra.mxu0 0.0
    %71 = vmatprep.subr.mxu0 0.0
    %72 = vmatpush2.msra.mxu0 0.0
    %73 = vmatprep.subr.mxu0 0.0
    %74 = vmatpush2.msra.mxu0 0.0
    %75 = vmatprep.subr.mxu0 0.0
    %76 = vmatpush2.msra.mxu0 0.0
    %77 = vmatprep.subr.mxu0 0.0
    %78 = vmatpush2.msra.mxu0 0.0
    %79 = vmatprep.subr.mxu0 0.0
    %80 = vmatpush2.msra.mxu0 0.0
    %81 = vmatprep.subr.mxu0 0.0
    %82 = vmatpush2.msra.mxu0 0.0
    %83 = vmatprep.subr.mxu0 0.0
    %84 = vmatpush2.msra.mxu0 0.0
    %85 = vmatprep.subr.mxu0 0.0
    %86 = vmatpush2.msra.mxu0 0.0
    %87 = vmatprep.subr.mxu0 0.0
    %88 = vmatpush2.msra.mxu0 0.0
    %89 = vmatprep.subr.mxu0 0.0
    %90 = vmatpush2.msra.mxu0 0.0
    %91 = vmatprep.subr.mxu0 0.0
    %92 = vmatpush2.msra.mxu0 0.0
    %93 = vmatprep.subr.mxu0 0.0
    %94 = vmatpush2.msra.mxu0 0.0
    %95 = vmatprep.subr.mxu0 0.0
    %96 = vmatpush2.msra.mxu0 0.0
    %97 = vmatprep.subr.mxu0 0.0
    %98 = vmatpush2.msra.mxu0 0.0
    %99 = vmatprep.mubr.f32.mxu0 0.0
    %100 = vmatmul.mubr.f32.gmra.mxu0 %v33
    %v101 = vpop.f32.mrf.mxu0
    %v102 = vadd.f32 %v29, %v101
    %v103 = vpop.f32.mrf.mxu0
    %104 = vdwg.mxu0
    %vm105 = vcmask 130048
    %106 = vst.msk [vmem:[#allocation2] sm:$0xff] %vm105, %v102
    // Predicated region
    $region14: #{tpu_custom_call.1} parent=1 // pred_check
      _
    $region15: #{tpu_custom_call.1} parent=1 // pred_check_branch
      %108 = sbr.rel (0) target = $region17
    $region16: #{tpu_custom_call.1} parent=1 // pred_region
      %s110 = ssub.s32 128, 128
      %111 = vsyncadd [#allocation3], %s110
      %s113 = sshll.u32 [#allocation2], 4
      %s114 = int_to_ptr.vmem [resolvable:$true] %s113
      %116 = dma.vmem_to_hbm [thread:$0]  %s114, 128, %s3, [#allocation3]
    $region17: #{tpu_custom_call.1} parent=1 // pred_fallthru
      _
    // Predicated region
    $region18: #{tpu_custom_call.1} parent=1 // pred_check
      _
    $region19: #{tpu_custom_call.1} parent=1 // pred_check_branch
      %118 = sbr.rel (0) target = $region21
    $region20: #{tpu_custom_call.1} parent=1 // pred_region
      %119 = dma.done [#allocation3], 128
    $region21: #{tpu_custom_call.1} parent=1 // pred_fallthru
      _
    %120 = vsyncpa [#allocation3], 1

</llo_original>
